<compile_context>
chip_gen: v5e
topology: v5e:2x2
jax: 0.10.0
libtpu: 0.0.40
codegen_flags: <defaults>
</compile_context>

<pallas_src>
import jax
import jax.numpy as jnp
from jax.experimental import pallas as pl
from jax.experimental.pallas import tpu as pltpu

# ----------------------------- dimensions ------------------------------------
B = 8            # batch (user-item pairs)
EMB_FIELD = 16   # per-field embedding width
PU_DIM = 32      # pu width (2 user fields x 16)
PI_DIM = 32      # pi width (2 item fields x 16)
HID = 64         # hidden width of the embedding MLPs
E_DIM = 32       # eu / ei width
REC_HID = 64     # rec_model hidden / mem_layer width
N_Y = 1          # rating output width

U_VOCAB = (16, 32)   # user field vocab sizes
I_VOCAB = (24, 40)   # item field vocab sizes

LANES = 128                       # everything padded to one 128-lane vreg row
W_BLOCKS = 5                      # TW1, W2, R1, MW, OW  (each 128x128)
W_ROWS = W_BLOCKS * LANES         # 640
BIAS_ROWS = 16                    # bias region padded to a full (16,128) tile
SLAB_ROWS = W_ROWS + BIAS_ROWS    # 656
# row offsets of each field's table inside the combined (pre-folded) table
ROW_OFF = (0, 16, 48, 72)         # u0, u1, i0, i1   (112 rows used, < 128)


# ----------------------------- Pallas kernel ---------------------------------
def base_model_kernel(ids_ref, w_ref, out_ref):
    f32 = jnp.float32
    wdt = w_ref.dtype
    tb = out_ref.shape[0]

    # Bias rows live in the last (tile-aligned) 16 rows of the slab; upcast once.
    bias = w_ref[W_ROWS:SLAB_ROWS, :].astype(f32)          # (16, 128) f32

    # ---- fused input_user_loading / input_item_loading + concat + layer 1 ----
    # Gather over the 4 embedding tables == one-hot (tb,128) @ stacked table;
    # the table was pre-multiplied by the block-diagonal layer-1 weight offline,
    # so one MXU push yields the layer-1 preactivations of BOTH embedding MLPs.
    lane = jax.lax.broadcasted_iota(jnp.int32, (tb, LANES), 1)
    m = lane == ids_ref[:, 0:1] + ROW_OFF[0]               # user field 0
    m |= lane == ids_ref[:, 1:2] + ROW_OFF[1]              # user field 1
    m |= lane == ids_ref[:, 2:3] + ROW_OFF[2]              # item field 0
    m |= lane == ids_ref[:, 3:4] + ROW_OFF[3]              # item field 1
    onehot = m.astype(wdt)                                 # single int->float cast

    # layer 1 (block-diagonal): h = [relu(pu@uw1+ub1) | relu(pi@iw1+ib1)]
    h = jnp.maximum(
        jnp.dot(onehot, w_ref[0:128, :], preferred_element_type=f32)
        + bias[0:1, :], 0.0)
    # layer 2 (block-diagonal): e = [eu | ei | 0]
    e = jnp.maximum(
        jnp.dot(h.astype(wdt), w_ref[128:256, :], preferred_element_type=f32)
        + bias[1:2, :], 0.0)
    # rec_model fc1 on concat(eu, ei)  (rw1u/rw1i stacked in the slab)
    h1 = jnp.maximum(
        jnp.dot(e.astype(wdt), w_ref[256:384, :], preferred_element_type=f32)
        + bias[2:3, :], 0.0)
    # rec_model mem_layer
    h2 = jnp.maximum(
        jnp.dot(h1.astype(wdt), w_ref[384:512, :], preferred_element_type=f32)
        + bias[3:4, :], 0.0)
    # output layer -> lane-dense (tb,128) store, rating in lane 0, zeros elsewhere
    out_ref[...] = (
        jnp.dot(h2.astype(wdt), w_ref[512:640, :], preferred_element_type=f32)
        + bias[4:5, :]
    ).astype(out_ref.dtype)


def base_model_forward(x1, x2, w_slab, *, tb=None):
    b = x1.shape[0]
    # Merge user & item categorical ids into one (b,4) int32 input (one DMA desc).
    ids = jnp.concatenate([x1, x2], axis=1).astype(jnp.int32)
    if tb is None:
        # small b: single step. Serving: tb ~256 (f32) / ~512 (bf16), and keep
        # >=2 grid steps so the "parallel" batch axis can use both v7x TCs.
        tb = b if b <= 256 else 256
    grid = (pl.cdiv(b, tb),)
    out = pl.pallas_call(
        base_model_kernel,
        out_shape=jax.ShapeDtypeStruct((b, LANES), jnp.float32),
        grid_spec=pltpu.PrefetchScalarGridSpec(
            num_scalar_prefetch=0,
            grid=grid,
            in_specs=[
                pl.BlockSpec((tb, 4), lambda i: (i, 0)),             # ids
                pl.BlockSpec((SLAB_ROWS, LANES), lambda i: (0, 0)),  # resident params
            ],
            out_specs=pl.BlockSpec((tb, LANES), lambda i: (i, 0)),
        ),
        compiler_params=pltpu.CompilerParams(
            dimension_semantics=("parallel",)),
    )(ids, w_slab)
    return out[:, :N_Y]   # rating column (kernel store itself is lane-dense)


# ----------------------------- parameter init / packing -----------------------
def init_params(key):
    def nrm(k, shape, scale=0.1):
        return (scale * jax.random.normal(k, shape)).astype(jnp.float32)

    keys = jax.random.split(key, 32)
    it = iter(keys)

    # input-loading embedding tables
    u_tables = [nrm(next(it), (v, EMB_FIELD)) for v in U_VOCAB]
    i_tables = [nrm(next(it), (v, EMB_FIELD)) for v in I_VOCAB]

    # user_embedding MLP
    uw1, ub1 = nrm(next(it), (PU_DIM, HID)), nrm(next(it), (1, HID))
    uw2, ub2 = nrm(next(it), (HID, E_DIM)), nrm(next(it), (1, E_DIM))
    # item_embedding MLP
    iw1, ib1 = nrm(next(it), (PI_DIM, HID)), nrm(next(it), (1, HID))
    iw2, ib2 = nrm(next(it), (HID, E_DIM)), nrm(next(it), (1, E_DIM))
    # rec_model: fc1 (split over the concat halves), mem_layer, output
    rw1u, rw1i = nrm(next(it), (E_DIM, REC_HID)), nrm(next(it), (E_DIM, REC_HID))
    rb1 = nrm(next(it), (1, REC_HID))
    mw, mb = nrm(next(it), (REC_HID, REC_HID)), nrm(next(it), (1, REC_HID))
    ow, ob = nrm(next(it), (REC_HID, N_Y)), nrm(next(it), (1, N_Y))

    raw = (uw1, ub1, uw2, ub2, iw1, ib1, iw2, ib2,
           rw1u, rw1i, rb1, mw, mb, ow, ob)
    return u_tables, i_tables, raw


def pack_params(u_tables, i_tables, p, dtype=jnp.bfloat16):
    """Pack embedding tables + all weights + all biases into ONE padded slab.

    Done once, offline. The zero blocks make the block-diagonal merge of the
    user/item branches exact; T@W1 is folded here (no nonlinearity between
    them) at HIGHEST precision so the f32 validation path stays exact."""
    (uw1, ub1, uw2, ub2, iw1, ib1, iw2, ib2,
     rw1u, rw1i, rb1, mw, mb, ow, ob) = p
    f32 = jnp.float32

    # combined embedding-table slab T (gather realized as onehot @ T)
    T = jnp.zeros((LANES, LANES), f32)
    T = T.at[ROW_OFF[0]:ROW_OFF[0] + U_VOCAB[0], 0:16].set(u_tables[0])
    T = T.at[ROW_OFF[1]:ROW_OFF[1] + U_VOCAB[1], 16:32].set(u_tables[1])
    T = T.at[ROW_OFF[2]:ROW_OFF[2] + I_VOCAB[0], 32:48].set(i_tables[0])
    T = T.at[ROW_OFF[3]:ROW_OFF[3] + I_VOCAB[1], 48:64].set(i_tables[1])

    # embedding layer 1, block-diagonal over user/item
    W1 = jnp.zeros((LANES, LANES), f32)
    W1 = W1.at[0:32, 0:64].set(uw1)
    W1 = W1.at[32:64, 64:128].set(iw1)

    # offline fold of the gather into layer 1 (exact; removes one MXU push)
    TW1 = jnp.dot(T, W1, precision=jax.lax.Precision.HIGHEST)

    # embedding layer 2, block-diagonal
    W2 = jnp.zeros((LANES, LANES), f32)
    W2 = W2.at[0:64, 0:32].set(uw2)
    W2 = W2.at[64:128, 32:64].set(iw2)

    # rec_model fc1: concat(eu, ei) @ rw1  ==  eu@rw1u + ei@rw1i
    R1 = jnp.zeros((LANES, LANES), f32)
    R1 = R1.at[0:32, 0:64].set(rw1u)
    R1 = R1.at[32:64, 0:64].set(rw1i)

    # mem_layer
    MW = jnp.zeros((LANES, LANES), f32)
    MW = MW.at[0:64, 0:64].set(mw)

    # output layer (rating goes to lane 0; other lanes stay 0 -> lane-dense store)
    OW = jnp.zeros((LANES, LANES), f32)
    OW = OW.at[0:64, 0:1].set(ow)

    # bias rows appended to the same slab (tile-aligned 16-row region at offset 640)
    BIAS = jnp.zeros((BIAS_ROWS, LANES), f32)
    BIAS = BIAS.at[0, 0:64].set(ub1[0]).at[0, 64:128].set(ib1[0])
    BIAS = BIAS.at[1, 0:32].set(ub2[0]).at[1, 32:64].set(ib2[0])
    BIAS = BIAS.at[2, 0:64].set(rb1[0])
    BIAS = BIAS.at[3, 0:64].set(mb[0])
    BIAS = BIAS.at[4, 0:1].set(ob[0])

    return jnp.concatenate([TW1, W2, R1, MW, OW, BIAS], axis=0).astype(dtype)


# ----------------------------- reference (plain JAX) --------------------------
def reference_forward(x1, x2, u_tables, i_tables, p):
    (uw1, ub1, uw2, ub2, iw1, ib1, iw2, ib2,
     rw1u, rw1i, rb1, mw, mb, ow, ob) = p
    pu = jnp.concatenate(
        [jnp.take(t, x1[:, f], axis=0) for f, t in enumerate(u_tables)], axis=-1)
    pi = jnp.concatenate(
        [jnp.take(t, x2[:, f], axis=0) for f, t in enumerate(i_tables)], axis=-1)
    hu = jnp.maximum(pu @ uw1 + ub1, 0.0)
    eu = jnp.maximum(hu @ uw2 + ub2, 0.0)
    hi = jnp.maximum(pi @ iw1 + ib1, 0.0)
    ei = jnp.maximum(hi @ iw2 + ib2, 0.0)
    h1 = jnp.maximum(eu @ rw1u + ei @ rw1i + rb1, 0.0)
    h2 = jnp.maximum(h1 @ mw + mb, 0.0)
    return h2 @ ow + ob


# ----------------------------- main -------------------------------------------
if __name__ == "__main__":
    key = jax.random.PRNGKey(0)
    k_par, k_x1a, k_x1b, k_x2a, k_x2b = jax.random.split(key, 5)

    u_tables, i_tables, raw_params = init_params(k_par)

    # Raw categorical inputs: x1 (user) and x2 (item), each [B, 2] int32 field ids.
    x1 = jnp.stack([jax.random.randint(k_x1a, (B,), 0, U_VOCAB[0]),
                    jax.random.randint(k_x1b, (B,), 0, U_VOCAB[1])], axis=1).astype(jnp.int32)
    x2 = jnp.stack([jax.random.randint(k_x2a, (B,), 0, I_VOCAB[0]),
                    jax.random.randint(k_x2b, (B,), 0, I_VOCAB[1])], axis=1).astype(jnp.int32)

    ref = reference_forward(x1, x2, u_tables, i_tables, raw_params)

    # f32 slab: exact structural check against the plain-JAX reference.
    w_f32 = pack_params(u_tables, i_tables, raw_params, dtype=jnp.float32)
    rating_f32 = jax.block_until_ready(base_model_forward(x1, x2, w_f32))
    assert rating_f32.shape == (B, N_Y)
    assert jnp.allclose(rating_f32, ref, atol=1e-5, rtol=1e-5), "f32 mismatch vs reference"

    # bf16 slab: the recommended serving config on v5e/v6e/v7x (f32 accumulation,
    # f32 bias/ReLU) — looser tolerance against the f32 reference.
    w_bf16 = pack_params(u_tables, i_tables, raw_params, dtype=jnp.bfloat16)
    rating_bf16 = jax.block_until_ready(base_model_forward(x1, x2, w_bf16))
    assert rating_bf16.shape == (B, N_Y)
    assert jnp.allclose(rating_bf16, ref, atol=2e-2, rtol=2e-2), "bf16 mismatch vs reference"

    print("KERNEL_OK")
</pallas_src>

<mosaic_0001>
module attributes {stable_mosaic.version = 11 : i64} {
  func.func @base_model_kernel(%arg0: i32, %arg1: memref<8x4xi32, #tpu.memory_space<vmem>>, %arg2: memref<656x128xf32, #tpu.memory_space<vmem>>, %arg3: memref<8x128xf32, #tpu.memory_space<vmem>>) attributes {dimension_semantics = [#tpu.dimension_semantics<parallel>], iteration_bounds = array<i64: 1>, scalar_prefetch = 0 : i64, scratch_operands = 0 : i64, tpu.core_type = #tpu.core_type<tc>, window_params = [{transform_indices = @transform_0, window_bounds = array<i64: 8, 4>}, {pipeline_mode = #tpu.pipeline_mode<synchronous>, transform_indices = @transform_1, window_bounds = array<i64: 656, 128>}, {transform_indices = @transform_2, window_bounds = array<i64: 8, 128>}]} {
    %c640 = arith.constant 640 : index
    %c0 = arith.constant 0 : index
    %0 = vector.load %arg2[%c640, %c0] : memref<656x128xf32, #tpu.memory_space<vmem>>, vector<16x128xf32>
    %1 = tpu.iota {dimensions = array<i32: 1>} : vector<8x128xi32>
    %c0_0 = arith.constant 0 : index
    %c0_1 = arith.constant 0 : index
    %2 = vector.load %arg1[%c0_0, %c0_1] : memref<8x4xi32, #tpu.memory_space<vmem>>, vector<8x1xi32>
    %c0_i32 = arith.constant 0 : i32
    %3 = vector.broadcast %c0_i32 : i32 to vector<8x1xi32>
    %4 = arith.addi %2, %3 : vector<8x1xi32>
    %5 = vector.broadcast %4 : vector<8x1xi32> to vector<8x128xi32>
    %6 = arith.cmpi eq, %1, %5 : vector<8x128xi32>
    %c0_2 = arith.constant 0 : index
    %c1 = arith.constant 1 : index
    %7 = vector.load %arg1[%c0_2, %c1] : memref<8x4xi32, #tpu.memory_space<vmem>>, vector<8x1xi32>
    %c16_i32 = arith.constant 16 : i32
    %8 = vector.broadcast %c16_i32 : i32 to vector<8x1xi32>
    %9 = arith.addi %7, %8 : vector<8x1xi32>
    %10 = vector.broadcast %9 : vector<8x1xi32> to vector<8x128xi32>
    %11 = arith.cmpi eq, %1, %10 : vector<8x128xi32>
    %12 = arith.ori %6, %11 : vector<8x128xi1>
    %c0_3 = arith.constant 0 : index
    %c2 = arith.constant 2 : index
    %13 = vector.load %arg1[%c0_3, %c2] : memref<8x4xi32, #tpu.memory_space<vmem>>, vector<8x1xi32>
    %c48_i32 = arith.constant 48 : i32
    %14 = vector.broadcast %c48_i32 : i32 to vector<8x1xi32>
    %15 = arith.addi %13, %14 : vector<8x1xi32>
    %16 = vector.broadcast %15 : vector<8x1xi32> to vector<8x128xi32>
    %17 = arith.cmpi eq, %1, %16 : vector<8x128xi32>
    %18 = arith.ori %12, %17 : vector<8x128xi1>
    %c0_4 = arith.constant 0 : index
    %c3 = arith.constant 3 : index
    %19 = vector.load %arg1[%c0_4, %c3] : memref<8x4xi32, #tpu.memory_space<vmem>>, vector<8x1xi32>
    %c72_i32 = arith.constant 72 : i32
    %20 = vector.broadcast %c72_i32 : i32 to vector<8x1xi32>
    %21 = arith.addi %19, %20 : vector<8x1xi32>
    %22 = vector.broadcast %21 : vector<8x1xi32> to vector<8x128xi32>
    %23 = arith.cmpi eq, %1, %22 : vector<8x128xi32>
    %24 = arith.ori %18, %23 : vector<8x128xi1>
    %25 = arith.extui %24 : vector<8x128xi1> to vector<8x128xi32>
    %26 = arith.sitofp %25 : vector<8x128xi32> to vector<8x128xf32>
    %c0_5 = arith.constant 0 : index
    %c0_6 = arith.constant 0 : index
    %27 = vector.load %arg2[%c0_5, %c0_6] : memref<656x128xf32, #tpu.memory_space<vmem>>, vector<128x128xf32>
    %cst = arith.constant dense<0.000000e+00> : vector<8x128xf32>
    %28 = tpu.matmul %26, %27, %cst {dimension_numbers = #tpu.dot_dimension_numbers<[1], [0], [0], [1], [0, 0, 1, 1], [], []>} : vector<8x128xf32>, vector<128x128xf32>, vector<8x128xf32> -> vector<8x128xf32>
    %29 = vector.extract_strided_slice %0 {offsets = [0, 0], sizes = [1, 128], strides = [1, 1]} : vector<16x128xf32> to vector<1x128xf32>
    %30 = vector.broadcast %29 : vector<1x128xf32> to vector<8x128xf32>
    %31 = arith.addf %28, %30 : vector<8x128xf32>
    %cst_7 = arith.constant 0.000000e+00 : f32
    %32 = vector.broadcast %cst_7 : f32 to vector<8x128xf32>
    %33 = arith.maximumf %31, %32 : vector<8x128xf32>
    %c128 = arith.constant 128 : index
    %c0_8 = arith.constant 0 : index
    %34 = vector.load %arg2[%c128, %c0_8] : memref<656x128xf32, #tpu.memory_space<vmem>>, vector<128x128xf32>
    %cst_9 = arith.constant dense<0.000000e+00> : vector<8x128xf32>
    %35 = tpu.matmul %33, %34, %cst_9 {dimension_numbers = #tpu.dot_dimension_numbers<[1], [0], [0], [1], [0, 0, 1, 1], [], []>} : vector<8x128xf32>, vector<128x128xf32>, vector<8x128xf32> -> vector<8x128xf32>
    %36 = vector.extract_strided_slice %0 {offsets = [1, 0], sizes = [1, 128], strides = [1, 1]} : vector<16x128xf32> to vector<1x128xf32>
    %37 = vector.broadcast %36 : vector<1x128xf32> to vector<8x128xf32>
    %38 = arith.addf %35, %37 : vector<8x128xf32>
    %cst_10 = arith.constant 0.000000e+00 : f32
    %39 = vector.broadcast %cst_10 : f32 to vector<8x128xf32>
    %40 = arith.maximumf %38, %39 : vector<8x128xf32>
    %c256 = arith.constant 256 : index
    %c0_11 = arith.constant 0 : index
    %41 = vector.load %arg2[%c256, %c0_11] : memref<656x128xf32, #tpu.memory_space<vmem>>, vector<128x128xf32>
    %cst_12 = arith.constant dense<0.000000e+00> : vector<8x128xf32>
    %42 = tpu.matmul %40, %41, %cst_12 {dimension_numbers = #tpu.dot_dimension_numbers<[1], [0], [0], [1], [0, 0, 1, 1], [], []>} : vector<8x128xf32>, vector<128x128xf32>, vector<8x128xf32> -> vector<8x128xf32>
    %43 = vector.extract_strided_slice %0 {offsets = [2, 0], sizes = [1, 128], strides = [1, 1]} : vector<16x128xf32> to vector<1x128xf32>
    %44 = vector.broadcast %43 : vector<1x128xf32> to vector<8x128xf32>
    %45 = arith.addf %42, %44 : vector<8x128xf32>
    %cst_13 = arith.constant 0.000000e+00 : f32
    %46 = vector.broadcast %cst_13 : f32 to vector<8x128xf32>
    %47 = arith.maximumf %45, %46 : vector<8x128xf32>
    %c384 = arith.constant 384 : index
    %c0_14 = arith.constant 0 : index
    %48 = vector.load %arg2[%c384, %c0_14] : memref<656x128xf32, #tpu.memory_space<vmem>>, vector<128x128xf32>
    %cst_15 = arith.constant dense<0.000000e+00> : vector<8x128xf32>
    %49 = tpu.matmul %47, %48, %cst_15 {dimension_numbers = #tpu.dot_dimension_numbers<[1], [0], [0], [1], [0, 0, 1, 1], [], []>} : vector<8x128xf32>, vector<128x128xf32>, vector<8x128xf32> -> vector<8x128xf32>
    %50 = vector.extract_strided_slice %0 {offsets = [3, 0], sizes = [1, 128], strides = [1, 1]} : vector<16x128xf32> to vector<1x128xf32>
    %51 = vector.broadcast %50 : vector<1x128xf32> to vector<8x128xf32>
    %52 = arith.addf %49, %51 : vector<8x128xf32>
    %cst_16 = arith.constant 0.000000e+00 : f32
    %53 = vector.broadcast %cst_16 : f32 to vector<8x128xf32>
    %54 = arith.maximumf %52, %53 : vector<8x128xf32>
    %c512 = arith.constant 512 : index
    %c0_17 = arith.constant 0 : index
    %55 = vector.load %arg2[%c512, %c0_17] : memref<656x128xf32, #tpu.memory_space<vmem>>, vector<128x128xf32>
    %cst_18 = arith.constant dense<0.000000e+00> : vector<8x128xf32>
    %56 = tpu.matmul %54, %55, %cst_18 {dimension_numbers = #tpu.dot_dimension_numbers<[1], [0], [0], [1], [0, 0, 1, 1], [], []>} : vector<8x128xf32>, vector<128x128xf32>, vector<8x128xf32> -> vector<8x128xf32>
    %57 = vector.extract_strided_slice %0 {offsets = [4, 0], sizes = [1, 128], strides = [1, 1]} : vector<16x128xf32> to vector<1x128xf32>
    %58 = vector.broadcast %57 : vector<1x128xf32> to vector<8x128xf32>
    %59 = arith.addf %56, %58 : vector<8x128xf32>
    %c0_19 = arith.constant 0 : index
    %c0_20 = arith.constant 0 : index
    %60 = vector.load %arg3[%c0_19, %c0_20] : memref<8x128xf32, #tpu.memory_space<vmem>>, vector<8x128xf32>
    tpu.vector_store %arg3[%c0_19, %c0_20], %59 {strides = array<i32>} : memref<8x128xf32, #tpu.memory_space<vmem>>, vector<8x128xf32>,
    return
  }
  func.func @transform_0(%arg0: i32) -> (i32, i32) {
    %c0_i32 = arith.constant 0 : i32
    %c0_i32_0 = arith.constant 0 : i32
    return %arg0, %c0_i32 : i32, i32
  }
  func.func @transform_1(%arg0: i32) -> (i32, i32) {
    %c0_i32 = arith.constant 0 : i32
    %c0_i32_0 = arith.constant 0 : i32
    %c0_i32_1 = arith.constant 0 : i32
    return %c0_i32, %c0_i32_0 : i32, i32
  }
  func.func @transform_2(%arg0: i32) -> (i32, i32) {
    %c0_i32 = arith.constant 0 : i32
    %c0_i32_0 = arith.constant 0 : i32
    return %arg0, %c0_i32 : i32, i32
  }
}

</mosaic_0001>

<llo_original>
// kernel: tpu_custom_call.1
$region0: #{tpu_custom_call.1}
  #allocation0 [shape = 'u32[]', space=smem, size = 0x4, offset = 0x4, fixed_abs, tag = 'smem constant byte address 0x4 - core index']
  #allocation1 [shape = 'u32[72,128]{1,0:T(1,128)}', space=vmem, size = 0x9000, scoped, tag = 'internal scratch']
  %s0 = inlined_call_operand.vmem [shape: s32[8,4], index: 0, kind: input, shape index: {}]
  %s1 = inlined_call_operand.hbm [shape: f32[656,128], index: 1, kind: input, shape index: {}]
  %s2 = inlined_call_operand.hbm [shape: f32[8,128], index: 2, kind: output, shape index: {}]
  %s3 = sld [smem:[#allocation0]]
  $region22: #{tpu_custom_call.1} parent=0
    _
  %s5 = ssub.s32 1, %s3
  %s6 = scalar_select 0, %s5, %s3
  $region1: #{tpu_custom_call.1} parent=0
    #allocation2 [shape = 'u8[335872]{0}', space=vmem, size = 0x52000, scoped, tag = 'input window, operand 1, single buffered']
    #allocation3 [shape = 's32[1]{0}', space=sflag, size = 0x4, scoped, tag = 'scoped memory for tpu_custom_call.1']
    #allocation4 [shape = 's32[1]{0}', space=sflag, size = 0x4, scoped, tag = 'scoped memory for tpu_custom_call.1']
    #allocation5 [shape = 'u8[4096]{0}', space=vmem, size = 0x1000, scoped, tag = 'output window, operand 0, single buffered']
    %7 = vsyncpa [#allocation3], 0
    %8 = vsyncpa [#allocation4], 0
    // Predicated region
    $region2: #{tpu_custom_call.1} parent=1 // pred_check
      _
    $region3: #{tpu_custom_call.1} parent=1 // pred_check_branch
      %10 = sbr.rel (0) target = $region5
    $region4: #{tpu_custom_call.1} parent=1 // pred_region
      _
    $region5: #{tpu_custom_call.1} parent=1 // pred_fallthru
      _
    // Predicated region
    $region6: #{tpu_custom_call.1} parent=1 // pred_check
      _
    $region7: #{tpu_custom_call.1} parent=1 // pred_check_branch
      %12 = sbr.rel (0) target = $region9
    $region8: #{tpu_custom_call.1} parent=1 // pred_region
      %14 = vsyncadd [#allocation3], 0
      %s15 = sshll.u32 %s1, 4
      %s16 = int_to_ptr.hbm [resolvable:$true] %s15
      %s17 = sshll.u32 [#allocation2], 4
      %s18 = int_to_ptr.vmem [resolvable:$true] %s17
      %23 = dma.hbm_to_vmem [thread:$0]  %s16, 10496, %s18, [#allocation3], 128, 128, 8
    $region9: #{tpu_custom_call.1} parent=1 // pred_fallthru
      _
    // Predicated region
    $region10: #{tpu_custom_call.1} parent=1 // pred_check
      _
    $region11: #{tpu_custom_call.1} parent=1 // pred_check_branch
      %25 = sbr.rel (0) target = $region13
    $region12: #{tpu_custom_call.1} parent=1 // pred_region
      %27 = dma.done [#allocation3], 10496
    $region13: #{tpu_custom_call.1} parent=1 // pred_fallthru
      _
    %v28 = vld [vmem:[#allocation2 + $0x280] sm:$0xff]
    %v29 = vlaneseq
    %v30 = vand.u32 %v29, 127
    %v31 = vld [vmem:[%s0] sm:$0xff]
    %32 = vset.pattern.permute.xlu0 0
    %33 = vperm.xlu0 %32, %v31
    %v34 = vpop.permute.xlu0 %33
    %vm35 = vcmp.eq.s32.totalorder %v30, %v34
    %v36 = vadd.s32 %v31, 16
    %37 = vset.pattern.permute.xlu0 1
    %38 = vperm.xlu0 %37, %v36
    %v39 = vpop.permute.xlu0 %38
    %vm40 = vcmp.eq.s32.totalorder %v30, %v39
    %vm41 = vmor %vm35, %vm40
    %v42 = vadd.s32 %v31, 48
    %43 = vset.pattern.permute.xlu0 2
    %44 = vperm.xlu0 %43, %v42
    %v45 = vpop.permute.xlu0 %44
    %vm46 = vcmp.eq.s32.totalorder %v30, %v45
    %vm47 = vmor %vm41, %vm46
    %v48 = vadd.s32 %v31, 72
    %49 = vset.pattern.permute.xlu0 3
    %50 = vperm.xlu0 %49, %v48
    %v51 = vpop.permute.xlu0 %50
    %vm52 = vcmp.eq.s32.totalorder %v30, %v51
    %vm53 = vmor %vm47, %vm52
    %v54 = vsel %vm53, 1, 0
    %v55 = vcvt.s32.f32 %v54
    %v56 = vld [vmem:[#allocation2] sm:$0xff]
    %v57 = vld [vmem:[#allocation2 + $0x8] sm:$0xff]
    %v58 = vld [vmem:[#allocation2 + $0x10] sm:$0xff]
    %v59 = vld [vmem:[#allocation2 + $0x18] sm:$0xff]
    %v60 = vld [vmem:[#allocation2 + $0x20] sm:$0xff]
    %v61 = vld [vmem:[#allocation2 + $0x28] sm:$0xff]
    %v62 = vld [vmem:[#allocation2 + $0x30] sm:$0xff]
    %v63 = vld [vmem:[#allocation2 + $0x38] sm:$0xff]
    %v64 = vld [vmem:[#allocation2 + $0x40] sm:$0xff]
    %v65 = vld [vmem:[#allocation2 + $0x48] sm:$0xff]
    %v66 = vld [vmem:[#allocation2 + $0x50] sm:$0xff]
    %v67 = vld [vmem:[#allocation2 + $0x58] sm:$0xff]
    %v68 = vld [vmem:[#allocation2 + $0x60] sm:$0xff]
    %v69 = vld [vmem:[#allocation2 + $0x68] sm:$0xff]
    %v70 = vld [vmem:[#allocation2 + $0x70] sm:$0xff]
    %v71 = vld [vmem:[#allocation2 + $0x78] sm:$0xff]
    %v72 = vperm.slane %v28, 0
    %73 = vmatpush.msra.mxu0 %v71
    %74 = vmatpush.msra.mxu0 %v70
    %75 = vmatpush.msra.mxu0 %v69
    %76 = vmatpush.msra.mxu0 %v68
    %77 = vmatpush.msra.mxu0 %v67
    %78 = vmatpush.msra.mxu0 %v66
    %79 = vmatpush.msra.mxu0 %v65
    %80 = vmatpush.msra.mxu0 %v64
    %81 = vmatpush.msra.mxu0 %v63
    %82 = vmatpush.msra.mxu0 %v62
    %83 = vmatpush.msra.mxu0 %v61
    %84 = vmatpush.msra.mxu0 %v60
    %85 = vmatpush.msra.mxu0 %v59
    %86 = vmatpush.msra.mxu0 %v58
    %87 = vmatpush.msra.mxu0 %v57
    %88 = vmatpush.msra.mxu0 %v56
    %89 = vmatmul.f32.gmra.mxu0 %v55
    %v90 = vpop.f32.mrf.mxu0
    %v91 = vadd.f32 %v72, %v90
    %92 = vdwg.mxu0
    %v93 = vmax.f32 %v91, 0.0
    %v94 = vld [vmem:[#allocation2 + $0x80] sm:$0xff]
    %v95 = vld [vmem:[#allocation2 + $0x88] sm:$0xff]
    %v96 = vld [vmem:[#allocation2 + $0x90] sm:$0xff]
    %v97 = vld [vmem:[#allocation2 + $0x98] sm:$0xff]
    %v98 = vld [vmem:[#allocation2 + $0xa0] sm:$0xff]
    %v99 = vld [vmem:[#allocation2 + $0xa8] sm:$0xff]
    %v100 = vld [vmem:[#allocation2 + $0xb0] sm:$0xff]
    %v101 = vld [vmem:[#allocation2 + $0xb8] sm:$0xff]
    %v102 = vld [vmem:[#allocation2 + $0xc0] sm:$0xff]
    %v103 = vld [vmem:[#allocation2 + $0xc8] sm:$0xff]
    %v104 = vld [vmem:[#allocation2 + $0xd0] sm:$0xff]
    %v105 = vld [vmem:[#allocation2 + $0xd8] sm:$0xff]
    %v106 = vld [vmem:[#allocation2 + $0xe0] sm:$0xff]
    %v107 = vld [vmem:[#allocation2 + $0xe8] sm:$0xff]
    %v108 = vld [vmem:[#allocation2 + $0xf0] sm:$0xff]
    %v109 = vld [vmem:[#allocation2 + $0xf8] sm:$0xff]
    %v110 = vperm.slane %v28, 1
    %111 = vmatpush.msra.mxu0 %v109
    %112 = vmatpush.msra.mxu0 %v108
    %113 = vmatpush.msra.mxu0 %v107
    %114 = vmatpush.msra.mxu0 %v106
    %115 = vmatpush.msra.mxu0 %v105
    %116 = vmatpush.msra.mxu0 %v104
    %117 = vmatpush.msra.mxu0 %v103
    %118 = vmatpush.msra.mxu0 %v102
    %119 = vmatpush.msra.mxu0 %v101
    %120 = vmatpush.msra.mxu0 %v100
    %121 = vmatpush.msra.mxu0 %v99
    %122 = vmatpush.msra.mxu0 %v98
    %123 = vmatpush.msra.mxu0 %v97
    %124 = vmatpush.msra.mxu0 %v96
    %125 = vmatpush.msra.mxu0 %v95
    %126 = vmatpush.msra.mxu0 %v94
    %127 = vmatmul.f32.gmra.mxu0 %v93
    %v128 = vpop.f32.mrf.mxu0
    %v129 = vadd.f32 %v110, %v128
    %130 = vdwg.mxu0
    %v131 = vmax.f32 %v129, 0.0
    %v132 = vld [vmem:[#allocation2 + $0x100] sm:$0xff]
    %v133 = vld [vmem:[#allocation2 + $0x108] sm:$0xff]
    %v134 = vld [vmem:[#allocation2 + $0x110] sm:$0xff]
    %v135 = vld [vmem:[#allocation2 + $0x118] sm:$0xff]
    %v136 = vld [vmem:[#allocation2 + $0x120] sm:$0xff]
    %v137 = vld [vmem:[#allocation2 + $0x128] sm:$0xff]
    %v138 = vld [vmem:[#allocation2 + $0x130] sm:$0xff]
    %v139 = vld [vmem:[#allocation2 + $0x138] sm:$0xff]
    %v140 = vld [vmem:[#allocation2 + $0x140] sm:$0xff]
    %v141 = vld [vmem:[#allocation2 + $0x148] sm:$0xff]
    %v142 = vld [vmem:[#allocation2 + $0x150] sm:$0xff]
    %v143 = vld [vmem:[#allocation2 + $0x158] sm:$0xff]
    %v144 = vld [vmem:[#allocation2 + $0x160] sm:$0xff]
    %v145 = vld [vmem:[#allocation2 + $0x168] sm:$0xff]
    %v146 = vld [vmem:[#allocation2 + $0x170] sm:$0xff]
    %v147 = vld [vmem:[#allocation2 + $0x178] sm:$0xff]
    %v148 = vperm.slane %v28, 2
    %149 = vmatpush.msra.mxu0 %v147
    %150 = vmatpush.msra.mxu0 %v146
    %151 = vmatpush.msra.mxu0 %v145
    %152 = vmatpush.msra.mxu0 %v144
    %153 = vmatpush.msra.mxu0 %v143
    %154 = vmatpush.msra.mxu0 %v142
    %155 = vmatpush.msra.mxu0 %v141
    %156 = vmatpush.msra.mxu0 %v140
    %157 = vmatpush.msra.mxu0 %v139
    %158 = vmatpush.msra.mxu0 %v138
    %159 = vmatpush.msra.mxu0 %v137
    %160 = vmatpush.msra.mxu0 %v136
    %161 = vmatpush.msra.mxu0 %v135
    %162 = vmatpush.msra.mxu0 %v134
    %163 = vmatpush.msra.mxu0 %v133
    %164 = vmatpush.msra.mxu0 %v132
    %165 = vmatmul.f32.gmra.mxu0 %v131
    %v166 = vpop.f32.mrf.mxu0
    %v167 = vadd.f32 %v148, %v166
    %168 = vdwg.mxu0
    %v169 = vmax.f32 %v167, 0.0
    %v170 = vld [vmem:[#allocation2 + $0x180] sm:$0xff]
    %v171 = vld [vmem:[#allocation2 + $0x188] sm:$0xff]
    %v172 = vld [vmem:[#allocation2 + $0x190] sm:$0xff]
    %v173 = vld [vmem:[#allocation2 + $0x198] sm:$0xff]
    %v174 = vld [vmem:[#allocation2 + $0x1a0] sm:$0xff]
    %v175 = vld [vmem:[#allocation2 + $0x1a8] sm:$0xff]
    %v176 = vld [vmem:[#allocation2 + $0x1b0] sm:$0xff]
    %v177 = vld [vmem:[#allocation2 + $0x1b8] sm:$0xff]
    %v178 = vld [vmem:[#allocation2 + $0x1c0] sm:$0xff]
    %v179 = vld [vmem:[#allocation2 + $0x1c8] sm:$0xff]
    %v180 = vld [vmem:[#allocation2 + $0x1d0] sm:$0xff]
    %v181 = vld [vmem:[#allocation2 + $0x1d8] sm:$0xff]
    %v182 = vld [vmem:[#allocation2 + $0x1e0] sm:$0xff]
    %v183 = vld [vmem:[#allocation2 + $0x1e8] sm:$0xff]
    %v184 = vld [vmem:[#allocation2 + $0x1f0] sm:$0xff]
    %v185 = vld [vmem:[#allocation2 + $0x1f8] sm:$0xff]
    %v186 = vperm.slane %v28, 3
    %187 = vmatpush.msra.mxu0 %v185
    %188 = vmatpush.msra.mxu0 %v184
    %189 = vmatpush.msra.mxu0 %v183
    %190 = vmatpush.msra.mxu0 %v182
    %191 = vmatpush.msra.mxu0 %v181
    %192 = vmatpush.msra.mxu0 %v180
    %193 = vmatpush.msra.mxu0 %v179
    %194 = vmatpush.msra.mxu0 %v178
    %195 = vmatpush.msra.mxu0 %v177
    %196 = vmatpush.msra.mxu0 %v176
    %197 = vmatpush.msra.mxu0 %v175
    %198 = vmatpush.msra.mxu0 %v174
    %199 = vmatpush.msra.mxu0 %v173
    %200 = vmatpush.msra.mxu0 %v172
    %201 = vmatpush.msra.mxu0 %v171
    %202 = vmatpush.msra.mxu0 %v170
    %203 = vmatmul.f32.gmra.mxu0 %v169
    %v204 = vpop.f32.mrf.mxu0
    %v205 = vadd.f32 %v186, %v204
    %206 = vdwg.mxu0
    %v207 = vmax.f32 %v205, 0.0
    %v208 = vld [vmem:[#allocation2 + $0x200] sm:$0xff]
    %v209 = vld [vmem:[#allocation2 + $0x208] sm:$0xff]
    %v210 = vld [vmem:[#allocation2 + $0x210] sm:$0xff]
    %v211 = vld [vmem:[#allocation2 + $0x218] sm:$0xff]
    %v212 = vld [vmem:[#allocation2 + $0x220] sm:$0xff]
    %v213 = vld [vmem:[#allocation2 + $0x228] sm:$0xff]
    %v214 = vld [vmem:[#allocation2 + $0x230] sm:$0xff]
    %v215 = vld [vmem:[#allocation2 + $0x238] sm:$0xff]
    %v216 = vld [vmem:[#allocation2 + $0x240] sm:$0xff]
    %v217 = vld [vmem:[#allocation2 + $0x248] sm:$0xff]
    %v218 = vld [vmem:[#allocation2 + $0x250] sm:$0xff]
    %v219 = vld [vmem:[#allocation2 + $0x258] sm:$0xff]
    %v220 = vld [vmem:[#allocation2 + $0x260] sm:$0xff]
    %v221 = vld [vmem:[#allocation2 + $0x268] sm:$0xff]
    %v222 = vld [vmem:[#allocation2 + $0x270] sm:$0xff]
    %v223 = vld [vmem:[#allocation2 + $0x278] sm:$0xff]
    %v224 = vperm.slane %v28, 4
    %225 = vmatpush.msra.mxu0 %v223
    %226 = vmatpush.msra.mxu0 %v222
    %227 = vmatpush.msra.mxu0 %v221
    %228 = vmatpush.msra.mxu0 %v220
    %229 = vmatpush.msra.mxu0 %v219
    %230 = vmatpush.msra.mxu0 %v218
    %231 = vmatpush.msra.mxu0 %v217
    %232 = vmatpush.msra.mxu0 %v216
    %233 = vmatpush.msra.mxu0 %v215
    %234 = vmatpush.msra.mxu0 %v214
    %235 = vmatpush.msra.mxu0 %v213
    %236 = vmatpush.msra.mxu0 %v212
    %237 = vmatpush.msra.mxu0 %v211
    %238 = vmatpush.msra.mxu0 %v210
    %239 = vmatpush.msra.mxu0 %v209
    %240 = vmatpush.msra.mxu0 %v208
    %241 = vmatmul.f32.gmra.mxu0 %v207
    %v242 = vpop.f32.mrf.mxu0
    %v243 = vadd.f32 %v224, %v242
    %244 = vdwg.mxu0
    %245 = vst [vmem:[#allocation5] sm:$0xff] %v243
    // Predicated region
    $region14: #{tpu_custom_call.1} parent=1 // pred_check
      _
    $region15: #{tpu_custom_call.1} parent=1 // pred_check_branch
      %247 = sbr.rel (0) target = $region17
    $region16: #{tpu_custom_call.1} parent=1 // pred_region
      %249 = vsyncadd [#allocation4], 0
      %s251 = sshll.u32 [#allocation5], 4
      %s252 = int_to_ptr.vmem [resolvable:$true] %s251
      %s253 = sshll.u32 %s2, 4
      %s254 = int_to_ptr.hbm [resolvable:$true] %s253
      %256 = dma.vmem_to_hbm [thread:$0]  %s252, 128, %s254, [#allocation4]
    $region17: #{tpu_custom_call.1} parent=1 // pred_fallthru
      _
    // Predicated region
    $region18: #{tpu_custom_call.1} parent=1 // pred_check
      _
    $region19: #{tpu_custom_call.1} parent=1 // pred_check_branch
      %258 = sbr.rel (0) target = $region21
    $region20: #{tpu_custom_call.1} parent=1 // pred_region
      %260 = dma.done [#allocation4], 128
    $region21: #{tpu_custom_call.1} parent=1 // pred_fallthru
      _
    %261 = vsyncpa [#allocation3], 1
    %262 = vsyncpa [#allocation4], 1

</llo_original>
